<compile_context>
chip_gen: v7x
topology: tpu7x:2x2x1
jax: 0.10.0
libtpu: 0.0.40
codegen_flags: <defaults>
</compile_context>

<pallas_src>
import jax
import jax.numpy as jnp
from jax.experimental import pallas as pl
from jax.experimental.pallas import tpu as pltpu


def _heat_diffusion_kernel(scale_ref, L_ref, x_ref, o_ref, acc_ref):
    """Grid = (M blocks, K blocks).  Accumulate (-k) * sum_k L[i,k] @ x[k,:]."""
    kk = pl.program_id(1)

    # Zero the f32 accumulator on the first K step.
    @pl.when(kk == 0)
    def _():
        acc_ref[...] = jnp.zeros_like(acc_ref)

    # MXU matmul tile: (tm, tk) @ (tk, dim) accumulated in f32.
    acc_ref[...] += jnp.dot(
        L_ref[...], x_ref[...], preferred_element_type=jnp.float32
    )

    # On the last K step, apply the fused scalar (-k) and write the output tile.
    @pl.when(kk == pl.num_programs(1) - 1)
    def _():
        o_ref[...] = (scale_ref[0] * acc_ref[...]).astype(o_ref.dtype)


def _pick_tile(extent, candidates=(512, 256, 128)):
    """Largest 128-multiple tile that divides `extent`, else the full extent."""
    if extent <= candidates[-1]:
        return extent
    for c in candidates:
        if extent % c == 0:
            return c
    return extent  # fall back to a single full-extent block


def heat_diffusion_forward(L, x, k=1.0, *, tm=None, tk=None):
    """Computes k * ((-L) @ x) == (-k) * (L @ x), matching HeatDiffusion.forward."""
    n, n2 = L.shape
    assert n == n2, "L must be square"
    n_x, dim = x.shape
    assert n_x == n, "x rows must match L"

    if tm is None:
        tm = _pick_tile(n)
    if tk is None:
        tk = _pick_tile(n)
    assert n % tm == 0 and n % tk == 0, "tile sizes must divide n"
    assert tm == n or tm % 8 == 0, "tm must be a multiple of 8 (sublane)"
    assert tk == n or tk % 128 == 0, "tk must be a multiple of 128 (lane)"

    # Fuse the module's (-L) sign into the scalar; pass as a runtime SMEM scalar.
    scale = jnp.asarray([-1.0], dtype=jnp.float32) * jnp.asarray(k, dtype=jnp.float32)

    # Rough VMEM footprint (double-buffered L & x tiles, f32 acc, out tiles).
    isz_L = jnp.dtype(L.dtype).itemsize
    isz_x = jnp.dtype(x.dtype).itemsize
    vmem_est = (
        2 * tm * tk * isz_L
        + 2 * tk * dim * isz_x
        + tm * dim * 4
        + 2 * tm * dim * isz_x
    )
    cp_kwargs = dict(dimension_semantics=("parallel", "arbitrary"))
    if vmem_est > 14 * 1024 * 1024:
        # Raise the scoped-VMEM limit (16 MiB default on v5e) but stay under
        # v7x's 64 MiB physical VMEM.
        cp_kwargs["vmem_limit_bytes"] = min(vmem_est + (4 << 20), 64 << 20)

    grid = (n // tm, n // tk)  # (M blocks, K blocks) — reduction axis last

    return pl.pallas_call(
        _heat_diffusion_kernel,
        out_shape=jax.ShapeDtypeStruct((n, dim), x.dtype),
        grid_spec=pltpu.PrefetchScalarGridSpec(
            num_scalar_prefetch=1,  # `scale` lands in SMEM, passed to index_maps too
            grid=grid,
            in_specs=[
                # L tile: streamed from HBM exactly once (i outer, kk inner).
                pl.BlockSpec((tm, tk), lambda i, kk, s: (i, kk)),
                # x row-panel: full feature width resident (lane-dense, dim == full).
                pl.BlockSpec((tk, dim), lambda i, kk, s: (kk, 0)),
            ],
            # Output row-panel: full feature width -> unmasked lane-dense stores.
            out_specs=pl.BlockSpec((tm, dim), lambda i, kk, s: (i, 0)),
            scratch_shapes=[pltpu.VMEM((tm, dim), jnp.float32)],
        ),
        compiler_params=pltpu.CompilerParams(**cp_kwargs),
    )(scale, L, x)


def _make_laplacian(key, n):
    A = jax.random.uniform(key, (n, n), dtype=jnp.float32)
    A = 0.5 * (A + A.T)
    A = A * (1.0 - jnp.eye(n, dtype=jnp.float32))  # zero diagonal
    return jnp.diag(jnp.sum(A, axis=1)) - A        # graph Laplacian


if __name__ == "__main__":
    key = jax.random.PRNGKey(0)
    ka1, kx1, ka2, kx2 = jax.random.split(key, 4)

    # --- Test 1: small problem -> single-block (grid = (1, 1)) path ---
    n, dim = 128, 64
    kcoef = 2.0
    Lmat = _make_laplacian(ka1, n)
    x = jax.random.normal(kx1, (n, dim), dtype=jnp.float32)

    out = jax.block_until_ready(heat_diffusion_forward(Lmat, x, k=kcoef))
    ref = kcoef * ((-Lmat) @ x)
    assert out.shape == (n, dim)
    assert jnp.allclose(out, ref, atol=1e-3, rtol=1e-3), "mismatch vs reference (small)"

    # --- Test 2: forced multi-tile grid (exercises K-accumulation path) ---
    n2, dim2 = 512, 256
    kcoef2 = 0.7
    L2 = _make_laplacian(ka2, n2)
    x2 = jax.random.normal(kx2, (n2, dim2), dtype=jnp.float32)

    out2 = jax.block_until_ready(
        heat_diffusion_forward(L2, x2, k=kcoef2, tm=256, tk=128)
    )
    ref2 = kcoef2 * ((-L2) @ x2)
    assert out2.shape == (n2, dim2)
    assert jnp.allclose(out2, ref2, atol=1e-2, rtol=1e-3), "mismatch vs reference (tiled)"

    print("KERNEL_OK")
</pallas_src>

<mosaic_0001>
module attributes {stable_mosaic.version = 11 : i64} {
  func.func @_heat_diffusion_kernel(%arg0: i32, %arg1: i32, %arg2: memref<1xf32, #tpu.memory_space<smem>>, %arg3: memref<128x128xf32, #tpu.memory_space<vmem>>, %arg4: memref<128x64xf32, #tpu.memory_space<vmem>>, %arg5: memref<128x64xf32, #tpu.memory_space<vmem>>, %arg6: memref<128x64xf32, #tpu.memory_space<vmem>>) attributes {dimension_semantics = [#tpu.dimension_semantics<parallel>, #tpu.dimension_semantics<arbitrary>], iteration_bounds = array<i64: 1, 1>, scalar_prefetch = 1 : i64, scratch_operands = 1 : i64, tpu.core_type = #tpu.core_type<tc>, window_params = [{transform_indices = @transform_0, window_bounds = array<i64: 128, 128>}, {transform_indices = @transform_1, window_bounds = array<i64: 128, 64>}, {transform_indices = @transform_2, window_bounds = array<i64: 128, 64>}]} {
    %c0_i32 = arith.constant 0 : i32
    %0 = arith.cmpi eq, %arg1, %c0_i32 : i32
    %1 = arith.extui %0 : i1 to i32
    %c0_i32_0 = arith.constant 0 : i32
    %2 = arith.cmpi ne, %1, %c0_i32_0 : i32
    scf.if %2 {
      %cst_10 = arith.constant 0.000000e+00 : f32
      %12 = vector.broadcast %cst_10 : f32 to vector<128x64xf32>
      %c0_11 = arith.constant 0 : index
      %c0_12 = arith.constant 0 : index
      %13 = vector.load %arg6[%c0_11, %c0_12] : memref<128x64xf32, #tpu.memory_space<vmem>>, vector<128x64xf32>
      tpu.vector_store %arg6[%c0_11, %c0_12], %12 {strides = array<i32>} : memref<128x64xf32, #tpu.memory_space<vmem>>, vector<128x64xf32>,
    } else {
    }
    %c0 = arith.constant 0 : index
    %c0_1 = arith.constant 0 : index
    %3 = vector.load %arg6[%c0, %c0_1] : memref<128x64xf32, #tpu.memory_space<vmem>>, vector<128x64xf32>
    %c0_2 = arith.constant 0 : index
    %c0_3 = arith.constant 0 : index
    %4 = vector.load %arg3[%c0_2, %c0_3] : memref<128x128xf32, #tpu.memory_space<vmem>>, vector<128x128xf32>
    %c0_4 = arith.constant 0 : index
    %c0_5 = arith.constant 0 : index
    %5 = vector.load %arg4[%c0_4, %c0_5] : memref<128x64xf32, #tpu.memory_space<vmem>>, vector<128x64xf32>
    %cst = arith.constant dense<0.000000e+00> : vector<128x64xf32>
    %6 = tpu.matmul %4, %5, %cst {dimension_numbers = #tpu.dot_dimension_numbers<[1], [0], [0], [1], [0, 0, 1, 1], [], []>} : vector<128x128xf32>, vector<128x64xf32>, vector<128x64xf32> -> vector<128x64xf32>
    %7 = arith.addf %3, %6 : vector<128x64xf32>
    %c0_6 = arith.constant 0 : index
    %c0_7 = arith.constant 0 : index
    %8 = vector.load %arg6[%c0_6, %c0_7] : memref<128x64xf32, #tpu.memory_space<vmem>>, vector<128x64xf32>
    tpu.vector_store %arg6[%c0_6, %c0_7], %7 {strides = array<i32>} : memref<128x64xf32, #tpu.memory_space<vmem>>, vector<128x64xf32>,
    %c0_i32_8 = arith.constant 0 : i32
    %9 = arith.cmpi eq, %arg1, %c0_i32_8 : i32
    %10 = arith.extui %9 : i1 to i32
    %c0_i32_9 = arith.constant 0 : i32
    %11 = arith.cmpi ne, %10, %c0_i32_9 : i32
    scf.if %11 {
      %c0_10 = arith.constant 0 : index
      %12 = memref.load %arg2[%c0_10] : memref<1xf32, #tpu.memory_space<smem>>
      %c0_11 = arith.constant 0 : index
      %c0_12 = arith.constant 0 : index
      %13 = vector.load %arg6[%c0_11, %c0_12] : memref<128x64xf32, #tpu.memory_space<vmem>>, vector<128x64xf32>
      %14 = vector.broadcast %12 : f32 to vector<128x64xf32>
      %15 = arith.mulf %14, %13 : vector<128x64xf32>
      %c0_13 = arith.constant 0 : index
      %c0_14 = arith.constant 0 : index
      %16 = vector.load %arg5[%c0_13, %c0_14] : memref<128x64xf32, #tpu.memory_space<vmem>>, vector<128x64xf32>
      tpu.vector_store %arg5[%c0_13, %c0_14], %15 {strides = array<i32>} : memref<128x64xf32, #tpu.memory_space<vmem>>, vector<128x64xf32>,
    } else {
    }
    return
  }
  func.func @transform_0(%arg0: i32, %arg1: i32, %arg2: memref<1xf32, #tpu.memory_space<smem>>) -> (i32, i32) {
    %c0_i32 = arith.constant 0 : i32
    return %arg0, %arg1 : i32, i32
  }
  func.func @transform_1(%arg0: i32, %arg1: i32, %arg2: memref<1xf32, #tpu.memory_space<smem>>) -> (i32, i32) {
    %c0_i32 = arith.constant 0 : i32
    %c0_i32_0 = arith.constant 0 : i32
    return %arg1, %c0_i32 : i32, i32
  }
  func.func @transform_2(%arg0: i32, %arg1: i32, %arg2: memref<1xf32, #tpu.memory_space<smem>>) -> (i32, i32) {
    %c0_i32 = arith.constant 0 : i32
    %c0_i32_0 = arith.constant 0 : i32
    return %arg0, %c0_i32 : i32, i32
  }
}

</mosaic_0001>

<llo_original>
// kernel: tpu_custom_call.1
$region0: #{tpu_custom_call.1}
  #allocation0 [shape = 'u32[]', space=smem, size = 0x4, offset = 0x4, fixed_abs, tag = 'smem constant byte address 0x4 - core index']
  #allocation1 [shape = 'u32[144,128]{1,0:T(1,128)}', space=vmem, size = 0x12000, scoped, tag = 'internal scratch']
  #allocation2 [shape = 'f32[128,64]{1,0:T(8,128)}', space=vmem, size = 0x10000, scoped, tag = 'scratch operand']
  #allocation3 [shape = 's32[1]{0}', space=sflag, size = 0x4, scoped, tag = 'scoped memory for tpu_custom_call.1']
  #allocation4 [shape = 'f32[1]{0:T(128)S(6)}', space=smem, size = 0x200, scoped, tag = 'prefetched SMEM operand 0']
  %s0 = inlined_call_operand.<no memory space> [shape: f32[1], index: 0, kind: input, shape index: {}]
  %s1 = inlined_call_operand.vmem [shape: f32[128,128], index: 1, kind: input, shape index: {}]
  %s2 = inlined_call_operand.vmem [shape: f32[128,64], index: 2, kind: input, shape index: {}]
  %s3 = inlined_call_operand.vmem [shape: f32[128,64], index: 3, kind: output, shape index: {}]
  %s4 = sld [smem:[#allocation0]]
  $region26: #{tpu_custom_call.1} parent=0
    _
  %s6 = ssub.s32 1, %s4
  %s7 = scalar_select 0, %s6, %s4
  %8 = sst [smem:[#allocation4]] %s0
  // Predicated region
  $region2: #{tpu_custom_call.1} parent=0 // pred_check
    _
  $region3: #{tpu_custom_call.1} parent=0 // pred_check_branch
    %10 = sbr.rel (0) target = $region5
  $region4: #{tpu_custom_call.1} parent=0 // pred_region
    _
  $region5: #{tpu_custom_call.1} parent=0 // pred_fallthru
    _
  // Predicated region
  $region6: #{tpu_custom_call.1} parent=0 // pred_check
    _
  $region7: #{tpu_custom_call.1} parent=0 // pred_check_branch
    %12 = sbr.rel (0) target = $region9
  $region8: #{tpu_custom_call.1} parent=0 // pred_region
    _
  $region9: #{tpu_custom_call.1} parent=0 // pred_fallthru
    _
  %p13 = scmp.eq.s32.totalorder 0, 0
  // Predicated region
  $region10: #{tpu_custom_call.1} parent=0 // pred_check
    %p14 = pneg %p13
  $region11: #{tpu_custom_call.1} parent=0 // pred_check_branch
    %16 = sbr.rel (%p14) target = $region13
  $region12: #{tpu_custom_call.1} parent=0 // pred_region
    %vm17 = vcmask 523264
    %18 = vst.msk [vmem:[#allocation2] sm:$0xff] %vm17, 0.0
    %19 = vst.msk [vmem:[#allocation2 + $0x8] sm:$0xff] %vm17, 0.0
    %20 = vst.msk [vmem:[#allocation2 + $0x10] sm:$0xff] %vm17, 0.0
    %21 = vst.msk [vmem:[#allocation2 + $0x18] sm:$0xff] %vm17, 0.0
    %22 = vst.msk [vmem:[#allocation2 + $0x20] sm:$0xff] %vm17, 0.0
    %23 = vst.msk [vmem:[#allocation2 + $0x28] sm:$0xff] %vm17, 0.0
    %24 = vst.msk [vmem:[#allocation2 + $0x30] sm:$0xff] %vm17, 0.0
    %25 = vst.msk [vmem:[#allocation2 + $0x38] sm:$0xff] %vm17, 0.0
    %26 = vst.msk [vmem:[#allocation2 + $0x40] sm:$0xff] %vm17, 0.0
    %27 = vst.msk [vmem:[#allocation2 + $0x48] sm:$0xff] %vm17, 0.0
    %28 = vst.msk [vmem:[#allocation2 + $0x50] sm:$0xff] %vm17, 0.0
    %29 = vst.msk [vmem:[#allocation2 + $0x58] sm:$0xff] %vm17, 0.0
    %30 = vst.msk [vmem:[#allocation2 + $0x60] sm:$0xff] %vm17, 0.0
    %31 = vst.msk [vmem:[#allocation2 + $0x68] sm:$0xff] %vm17, 0.0
    %32 = vst.msk [vmem:[#allocation2 + $0x70] sm:$0xff] %vm17, 0.0
    %33 = vst.msk [vmem:[#allocation2 + $0x78] sm:$0xff] %vm17, 0.0
  $region13: #{tpu_custom_call.1} parent=0 // pred_fallthru
    _
  %v34 = vld [vmem:[#allocation2] sm:$0xff]
  %v35 = vld [vmem:[#allocation2 + $0x8] sm:$0xff]
  %v36 = vld [vmem:[#allocation2 + $0x10] sm:$0xff]
  %v37 = vld [vmem:[#allocation2 + $0x18] sm:$0xff]
  %v38 = vld [vmem:[#allocation2 + $0x20] sm:$0xff]
  %v39 = vld [vmem:[#allocation2 + $0x28] sm:$0xff]
  %v40 = vld [vmem:[#allocation2 + $0x30] sm:$0xff]
  %v41 = vld [vmem:[#allocation2 + $0x38] sm:$0xff]
  %v42 = vld [vmem:[#allocation2 + $0x40] sm:$0xff]
  %v43 = vld [vmem:[#allocation2 + $0x48] sm:$0xff]
  %v44 = vld [vmem:[#allocation2 + $0x50] sm:$0xff]
  %v45 = vld [vmem:[#allocation2 + $0x58] sm:$0xff]
  %v46 = vld [vmem:[#allocation2 + $0x60] sm:$0xff]
  %v47 = vld [vmem:[#allocation2 + $0x68] sm:$0xff]
  %v48 = vld [vmem:[#allocation2 + $0x70] sm:$0xff]
  %v49 = vld [vmem:[#allocation2 + $0x78] sm:$0xff]
  %v50 = vld [vmem:[%s1] sm:$0xff]
  %v51 = vld [vmem:[%s1 + $0x8] sm:$0xff]
  %v52 = vld [vmem:[%s1 + $0x10] sm:$0xff]
  %v53 = vld [vmem:[%s1 + $0x18] sm:$0xff]
  %v54 = vld [vmem:[%s1 + $0x20] sm:$0xff]
  %v55 = vld [vmem:[%s1 + $0x28] sm:$0xff]
  %v56 = vld [vmem:[%s1 + $0x30] sm:$0xff]
  %v57 = vld [vmem:[%s1 + $0x38] sm:$0xff]
  %v58 = vld [vmem:[%s1 + $0x40] sm:$0xff]
  %v59 = vld [vmem:[%s1 + $0x48] sm:$0xff]
  %v60 = vld [vmem:[%s1 + $0x50] sm:$0xff]
  %v61 = vld [vmem:[%s1 + $0x58] sm:$0xff]
  %v62 = vld [vmem:[%s1 + $0x60] sm:$0xff]
  %v63 = vld [vmem:[%s1 + $0x68] sm:$0xff]
  %v64 = vld [vmem:[%s1 + $0x70] sm:$0xff]
  %v65 = vld [vmem:[%s1 + $0x78] sm:$0xff]
  %v66 = vld [vmem:[%s2] sm:$0xff]
  %v67 = vld [vmem:[%s2 + $0x8] sm:$0xff]
  %v68 = vld [vmem:[%s2 + $0x10] sm:$0xff]
  %v69 = vld [vmem:[%s2 + $0x18] sm:$0xff]
  %v70 = vld [vmem:[%s2 + $0x20] sm:$0xff]
  %v71 = vld [vmem:[%s2 + $0x28] sm:$0xff]
  %v72 = vld [vmem:[%s2 + $0x30] sm:$0xff]
  %v73 = vld [vmem:[%s2 + $0x38] sm:$0xff]
  %v74 = vld [vmem:[%s2 + $0x40] sm:$0xff]
  %v75 = vld [vmem:[%s2 + $0x48] sm:$0xff]
  %v76 = vld [vmem:[%s2 + $0x50] sm:$0xff]
  %v77 = vld [vmem:[%s2 + $0x58] sm:$0xff]
  %v78 = vld [vmem:[%s2 + $0x60] sm:$0xff]
  %v79 = vld [vmem:[%s2 + $0x68] sm:$0xff]
  %v80 = vld [vmem:[%s2 + $0x70] sm:$0xff]
  %v81 = vld [vmem:[%s2 + $0x78] sm:$0xff]
  %82 = vmatprep.subr.mxu0 0.0
  %83 = vmatpush1.msra.mxu0 %v66
  %84 = vmatprep.subr.mxu0 0.0
  %85 = vmatpush1.msra.mxu0 %v67
  %86 = vmatprep.subr.mxu0 0.0
  %87 = vmatpush1.msra.mxu0 %v68
  %88 = vmatprep.subr.mxu0 0.0
  %89 = vmatpush1.msra.mxu0 %v69
  %90 = vmatprep.subr.mxu0 0.0
  %91 = vmatpush1.msra.mxu0 %v70
  %92 = vmatprep.subr.mxu0 0.0
  %93 = vmatpush1.msra.mxu0 %v71
  %94 = vmatprep.subr.mxu0 0.0
  %95 = vmatpush1.msra.mxu0 %v72
  %96 = vmatprep.subr.mxu0 0.0
  %97 = vmatpush1.msra.mxu0 %v73
  %98 = vmatprep.subr.mxu0 0.0
  %99 = vmatpush1.msra.mxu0 %v74
  %100 = vmatprep.subr.mxu0 0.0
  %101 = vmatpush1.msra.mxu0 %v75
  %102 = vmatprep.subr.mxu0 0.0
  %103 = vmatpush1.msra.mxu0 %v76
  %104 = vmatprep.subr.mxu0 0.0
  %105 = vmatpush1.msra.mxu0 %v77
  %106 = vmatprep.subr.mxu0 0.0
  %107 = vmatpush1.msra.mxu0 %v78
  %108 = vmatprep.subr.mxu0 0.0
  %109 = vmatpush1.msra.mxu0 %v79
  %110 = vmatprep.subr.mxu0 0.0
  %111 = vmatpush1.msra.mxu0 %v80
  %112 = vmatprep.subr.mxu0 0.0
  %113 = vmatpush1.msra.mxu0 %v81
  %114 = vmatprep.subr.mxu0 0.0
  %115 = vmatpush1.msra.mxu0 0.0
  %116 = vmatprep.subr.mxu0 0.0
  %117 = vmatpush1.msra.mxu0 0.0
  %118 = vmatprep.subr.mxu0 0.0
  %119 = vmatpush1.msra.mxu0 0.0
  %120 = vmatprep.subr.mxu0 0.0
  %121 = vmatpush1.msra.mxu0 0.0
  %122 = vmatprep.subr.mxu0 0.0
  %123 = vmatpush1.msra.mxu0 0.0
  %124 = vmatprep.subr.mxu0 0.0
  %125 = vmatpush1.msra.mxu0 0.0
  %126 = vmatprep.subr.mxu0 0.0
  %127 = vmatpush1.msra.mxu0 0.0
  %128 = vmatprep.subr.mxu0 0.0
  %129 = vmatpush1.msra.mxu0 0.0
  %130 = vmatprep.subr.mxu0 0.0
  %131 = vmatpush1.msra.mxu0 0.0
  %132 = vmatprep.subr.mxu0 0.0
  %133 = vmatpush1.msra.mxu0 0.0
  %134 = vmatprep.subr.mxu0 0.0
  %135 = vmatpush1.msra.mxu0 0.0
  %136 = vmatprep.subr.mxu0 0.0
  %137 = vmatpush1.msra.mxu0 0.0
  %138 = vmatprep.subr.mxu0 0.0
  %139 = vmatpush1.msra.mxu0 0.0
  %140 = vmatprep.subr.mxu0 0.0
  %141 = vmatpush1.msra.mxu0 0.0
  %142 = vmatprep.subr.mxu0 0.0
  %143 = vmatpush1.msra.mxu0 0.0
  %144 = vmatprep.subr.mxu0 0.0
  %145 = vmatpush1.msra.mxu0 0.0
  %146 = vmatprep.mubr.f32.mxu0 0.0
  %147 = vmatmul.mubr.f32.gmra.mrb[0].mxu0 %v50
  %v148 = vpop.f32.mrb[0].mxu0
  %v149 = vadd.f32 0.0, %v148
  %v150 = vpop.f32.mrb[0].mxu0
  %151 = vmatprep.mubr.f32.mxu0 0.0
  %152 = vmatmul.mubr.f32.gmra.mrb[0].mxu0 %v51
  %v153 = vpop.f32.mrb[0].mxu0
  %v154 = vadd.f32 0.0, %v153
  %v155 = vpop.f32.mrb[0].mxu0
  %156 = vmatprep.mubr.f32.mxu0 0.0
  %157 = vmatmul.mubr.f32.gmra.mrb[0].mxu0 %v52
  %v158 = vpop.f32.mrb[0].mxu0
  %v159 = vadd.f32 0.0, %v158
  %v160 = vpop.f32.mrb[0].mxu0
  %161 = vmatprep.mubr.f32.mxu0 0.0
  %162 = vmatmul.mubr.f32.gmra.mrb[0].mxu0 %v53
  %v163 = vpop.f32.mrb[0].mxu0
  %v164 = vadd.f32 0.0, %v163
  %v165 = vpop.f32.mrb[0].mxu0
  %166 = vmatprep.mubr.f32.mxu0 0.0
  %167 = vmatmul.mubr.f32.gmra.mrb[0].mxu0 %v54
  %v168 = vpop.f32.mrb[0].mxu0
  %v169 = vadd.f32 0.0, %v168
  %v170 = vpop.f32.mrb[0].mxu0
  %171 = vmatprep.mubr.f32.mxu0 0.0
  %172 = vmatmul.mubr.f32.gmra.mrb[0].mxu0 %v55
  %v173 = vpop.f32.mrb[0].mxu0
  %v174 = vadd.f32 0.0, %v173
  %v175 = vpop.f32.mrb[0].mxu0
  %176 = vmatprep.mubr.f32.mxu0 0.0
  %177 = vmatmul.mubr.f32.gmra.mrb[0].mxu0 %v56
  %v178 = vpop.f32.mrb[0].mxu0
  %v179 = vadd.f32 0.0, %v178
  %v180 = vpop.f32.mrb[0].mxu0
  %181 = vmatprep.mubr.f32.mxu0 0.0
  %182 = vmatmul.mubr.f32.gmra.mrb[0].mxu0 %v57
  %v183 = vpop.f32.mrb[0].mxu0
  %v184 = vadd.f32 0.0, %v183
  %v185 = vpop.f32.mrb[0].mxu0
  %186 = vmatprep.mubr.f32.mxu0 0.0
  %187 = vmatmul.mubr.f32.gmra.mrb[0].mxu0 %v58
  %v188 = vpop.f32.mrb[0].mxu0
  %v189 = vadd.f32 0.0, %v188
  %v190 = vpop.f32.mrb[0].mxu0
  %191 = vmatprep.mubr.f32.mxu0 0.0
  %192 = vmatmul.mubr.f32.gmra.mrb[0].mxu0 %v59
  %v193 = vpop.f32.mrb[0].mxu0
  %v194 = vadd.f32 0.0, %v193
  %v195 = vpop.f32.mrb[0].mxu0
  %196 = vmatprep.mubr.f32.mxu0 0.0
  %197 = vmatmul.mubr.f32.gmra.mrb[0].mxu0 %v60
  %v198 = vpop.f32.mrb[0].mxu0
  %v199 = vadd.f32 0.0, %v198
  %v200 = vpop.f32.mrb[0].mxu0
  %201 = vmatprep.mubr.f32.mxu0 0.0
  %202 = vmatmul.mubr.f32.gmra.mrb[0].mxu0 %v61
  %v203 = vpop.f32.mrb[0].mxu0
  %v204 = vadd.f32 0.0, %v203
  %v205 = vpop.f32.mrb[0].mxu0
  %206 = vmatprep.mubr.f32.mxu0 0.0
  %207 = vmatmul.mubr.f32.gmra.mrb[0].mxu0 %v62
  %v208 = vpop.f32.mrb[0].mxu0
  %v209 = vadd.f32 0.0, %v208
  %v210 = vpop.f32.mrb[0].mxu0
  %211 = vmatprep.mubr.f32.mxu0 0.0
  %212 = vmatmul.mubr.f32.gmra.mrb[0].mxu0 %v63
  %v213 = vpop.f32.mrb[0].mxu0
  %v214 = vadd.f32 0.0, %v213
  %v215 = vpop.f32.mrb[0].mxu0
  %216 = vmatprep.mubr.f32.mxu0 0.0
  %217 = vmatmul.mubr.f32.gmra.mrb[0].mxu0 %v64
  %v218 = vpop.f32.mrb[0].mxu0
  %v219 = vadd.f32 0.0, %v218
  %v220 = vpop.f32.mrb[0].mxu0
  %221 = vmatprep.mubr.f32.mxu0 0.0
  %222 = vmatmul.mubr.f32.gmra.mrb[0].mxu0 %v65
  %v223 = vpop.f32.mrb[0].mxu0
  %v224 = vadd.f32 0.0, %v223
  %v225 = vpop.f32.mrb[0].mxu0
  %226 = vdwg.mxu0
  %v227 = vadd.f32 %v34, %v149
  %v228 = vadd.f32 %v35, %v154
  %v229 = vadd.f32 %v36, %v159
  %v230 = vadd.f32 %v37, %v164
  %v231 = vadd.f32 %v38, %v169
  %v232 = vadd.f32 %v39, %v174
  %v233 = vadd.f32 %v40, %v179
  %v234 = vadd.f32 %v41, %v184
  %v235 = vadd.f32 %v42, %v189
  %v236 = vadd.f32 %v43, %v194
  %v237 = vadd.f32 %v44, %v199
  %v238 = vadd.f32 %v45, %v204
  %v239 = vadd.f32 %v46, %v209
  %v240 = vadd.f32 %v47, %v214
  %v241 = vadd.f32 %v48, %v219
  %v242 = vadd.f32 %v49, %v224
  %vm243 = vcmask 523264
  %244 = vst.msk [vmem:[#allocation2] sm:$0xff] %vm243, %v227
  %245 = vst.msk [vmem:[#allocation2 + $0x8] sm:$0xff] %vm243, %v228
  %246 = vst.msk [vmem:[#allocation2 + $0x10] sm:$0xff] %vm243, %v229
  %247 = vst.msk [vmem:[#allocation2 + $0x18] sm:$0xff] %vm243, %v230
  %248 = vst.msk [vmem:[#allocation2 + $0x20] sm:$0xff] %vm243, %v231
  %249 = vst.msk [vmem:[#allocation2 + $0x28] sm:$0xff] %vm243, %v232
  %250 = vst.msk [vmem:[#allocation2 + $0x30] sm:$0xff] %vm243, %v233
  %251 = vst.msk [vmem:[#allocation2 + $0x38] sm:$0xff] %vm243, %v234
  %252 = vst.msk [vmem:[#allocation2 + $0x40] sm:$0xff] %vm243, %v235
  %253 = vst.msk [vmem:[#allocation2 + $0x48] sm:$0xff] %vm243, %v236
  %254 = vst.msk [vmem:[#allocation2 + $0x50] sm:$0xff] %vm243, %v237
  %255 = vst.msk [vmem:[#allocation2 + $0x58] sm:$0xff] %vm243, %v238
  %256 = vst.msk [vmem:[#allocation2 + $0x60] sm:$0xff] %vm243, %v239
  %257 = vst.msk [vmem:[#allocation2 + $0x68] sm:$0xff] %vm243, %v240
  %258 = vst.msk [vmem:[#allocation2 + $0x70] sm:$0xff] %vm243, %v241
  %259 = vst.msk [vmem:[#allocation2 + $0x78] sm:$0xff] %vm243, %v242
  // Predicated region
  $region14: #{tpu_custom_call.1} parent=0 // pred_check
    %p260 = pneg %p13
  $region15: #{tpu_custom_call.1} parent=0 // pred_check_branch
    %262 = sbr.rel (%p260) target = $region17
  $region16: #{tpu_custom_call.1} parent=0 // pred_region
    %s263 = sld [smem:[#allocation4]]
    %v264 = vld [vmem:[#allocation2] sm:$0xff]
    %v265 = vld [vmem:[#allocation2 + $0x8] sm:$0xff]
    %v266 = vld [vmem:[#allocation2 + $0x10] sm:$0xff]
    %v267 = vld [vmem:[#allocation2 + $0x18] sm:$0xff]
    %v268 = vld [vmem:[#allocation2 + $0x20] sm:$0xff]
    %v269 = vld [vmem:[#allocation2 + $0x28] sm:$0xff]
    %v270 = vld [vmem:[#allocation2 + $0x30] sm:$0xff]
    %v271 = vld [vmem:[#allocation2 + $0x38] sm:$0xff]
    %v272 = vld [vmem:[#allocation2 + $0x40] sm:$0xff]
    %v273 = vld [vmem:[#allocation2 + $0x48] sm:$0xff]
    %v274 = vld [vmem:[#allocation2 + $0x50] sm:$0xff]
    %v275 = vld [vmem:[#allocation2 + $0x58] sm:$0xff]
    %v276 = vld [vmem:[#allocation2 + $0x60] sm:$0xff]
    %v277 = vld [vmem:[#allocation2 + $0x68] sm:$0xff]
    %v278 = vld [vmem:[#allocation2 + $0x70] sm:$0xff]
    %v279 = vld [vmem:[#allocation2 + $0x78] sm:$0xff]
    %v280 = vstv %s263
    %v281 = vmul.f32 %v280, %v264
    %v282 = vmul.f32 %v280, %v265
    %v283 = vmul.f32 %v280, %v266
    %v284 = vmul.f32 %v280, %v267
    %v285 = vmul.f32 %v280, %v268
    %v286 = vmul.f32 %v280, %v269
    %v287 = vmul.f32 %v280, %v270
    %v288 = vmul.f32 %v280, %v271
    %v289 = vmul.f32 %v280, %v272
    %v290 = vmul.f32 %v280, %v273
    %v291 = vmul.f32 %v280, %v274
    %v292 = vmul.f32 %v280, %v275
    %v293 = vmul.f32 %v280, %v276
    %v294 = vmul.f32 %v280, %v277
    %v295 = vmul.f32 %v280, %v278
    %v296 = vmul.f32 %v280, %v279
    %297 = vst.msk [vmem:[%s3] sm:$0xff] %vm243, %v281
    %298 = vst.msk [vmem:[%s3 + $0x8] sm:$0xff] %vm243, %v282
    %299 = vst.msk [vmem:[%s3 + $0x10] sm:$0xff] %vm243, %v283
    %300 = vst.msk [vmem:[%s3 + $0x18] sm:$0xff] %vm243, %v284
    %301 = vst.msk [vmem:[%s3 + $0x20] sm:$0xff] %vm243, %v285
    %302 = vst.msk [vmem:[%s3 + $0x28] sm:$0xff] %vm243, %v286
    %303 = vst.msk [vmem:[%s3 + $0x30] sm:$0xff] %vm243, %v287
    %304 = vst.msk [vmem:[%s3 + $0x38] sm:$0xff] %vm243, %v288
    %305 = vst.msk [vmem:[%s3 + $0x40] sm:$0xff] %vm243, %v289
    %306 = vst.msk [vmem:[%s3 + $0x48] sm:$0xff] %vm243, %v290
    %307 = vst.msk [vmem:[%s3 + $0x50] sm:$0xff] %vm243, %v291
    %308 = vst.msk [vmem:[%s3 + $0x58] sm:$0xff] %vm243, %v292
    %309 = vst.msk [vmem:[%s3 + $0x60] sm:$0xff] %vm243, %v293
    %310 = vst.msk [vmem:[%s3 + $0x68] sm:$0xff] %vm243, %v294
    %311 = vst.msk [vmem:[%s3 + $0x70] sm:$0xff] %vm243, %v295
    %312 = vst.msk [vmem:[%s3 + $0x78] sm:$0xff] %vm243, %v296
  $region17: #{tpu_custom_call.1} parent=0 // pred_fallthru
    _
  // Predicated region
  $region18: #{tpu_custom_call.1} parent=0 // pred_check
    _
  $region19: #{tpu_custom_call.1} parent=0 // pred_check_branch
    %314 = sbr.rel (0) target = $region21
  $region20: #{tpu_custom_call.1} parent=0 // pred_region
    _
  $region21: #{tpu_custom_call.1} parent=0 // pred_fallthru
    _
  // Predicated region
  $region22: #{tpu_custom_call.1} parent=0 // pred_check
    _
  $region23: #{tpu_custom_call.1} parent=0 // pred_check_branch
    %316 = sbr.rel (0) target = $region25
  $region24: #{tpu_custom_call.1} parent=0 // pred_region
    _
  $region25: #{tpu_custom_call.1} parent=0 // pred_fallthru
    _

</llo_original>
